<compile_context>
chip_gen: v5e
topology: v5e:2x2
jax: 0.10.0
libtpu: 0.0.40
codegen_flags: <defaults>
</compile_context>

<pallas_src>
import math

import jax
import jax.numpy as jnp
from jax.experimental import pallas as pl
from jax.experimental.pallas import tpu as pltpu

OUT_HW = 64  # F.interpolate target spatial size (64, 64)


def _input_transform_kernel(x_ref, rsel_ref, csel_ref, w_ref, b_ref, o_ref):
    # x_ref:    (H, W)           f32  input plane for batch item n
    # rsel_ref: (PR, H)          f32  one-hot output-row -> input-row selection
    # csel_ref: (W, PC)          f32  one-hot output-lane -> input-col selection
    # w_ref:    (c_tile, 1)      f32  equalized-LR-scaled conv weights (this channel tile)
    # b_ref:    (c_tile, 1)      f32  bias (this channel tile)
    # o_ref:    (c_tile, PR, PC) f32  output channel tile, lane/sublane-dense plane layout
    x = x_ref[...]
    rs = rsel_ref[...]
    cs = csel_ref[...]

    # Exact nearest-neighbour gather via two small one-hot matmuls (M = PR >= 32, not 1).
    # hi/lo split keeps the gather accurate even if f32 matmul lowers to one bf16 pass;
    # stage-1 results are exactly bf16-representable, so stage 2 adds no further error.
    x_hi = x.astype(jnp.bfloat16).astype(jnp.float32)
    x_lo = x - x_hi
    xc_hi = jnp.dot(x_hi, cs, preferred_element_type=jnp.float32)    # (H, PC)
    xc_lo = jnp.dot(x_lo, cs, preferred_element_type=jnp.float32)    # (H, PC)
    up = (jnp.dot(rs, xc_hi, preferred_element_type=jnp.float32) +
          jnp.dot(rs, xc_lo, preferred_element_type=jnp.float32))    # (PR, PC)

    # EqualizedLR 1x1 conv on a 1-channel input == per-output-channel scale + bias;
    # the whole channel tile is one broadcast multiply/add (no per-channel loop).
    w = w_ref[...][:, :, None]                                       # (c_tile, 1, 1)
    b = b_ref[...][:, :, None]
    o_ref[...] = up[None, :, :] * w + b                              # (c_tile, PR, PC)


def _nearest_indices(in_size, out_size=OUT_HW):
    # PyTorch F.interpolate(mode='nearest'): src_idx = floor(dst_idx * in / out).
    return [(d * in_size) // out_size for d in range(out_size)]


def _pick_c_tile(out_c, plane_bytes):
    """Largest channel tile keeping the output block <= ~4 MiB, with c_tile == out_c or a
    multiple of 8 so the (c_tile, 1) weight/bias blocks obey the (8,128) rule."""
    budget = 4 * 1024 * 1024
    max_ch = max(1, budget // plane_bytes)
    if out_c <= max_ch:
        return out_c
    best = None
    for d in range(8, max_ch + 1, 8):
        if out_c % d == 0:
            best = d
    return best if best is not None else out_c


def input_transform_forward(x, weight, bias, in_c):
    """x: (N,H,W) f32, weight: (out_c,1,1,1), bias: (out_c,) -> (N,out_c,64,64) f32."""
    N, H, W = x.shape
    out_c = weight.shape[0]
    assert weight.shape[1:] == (1, 1, 1), weight.shape
    assert in_c == 1, "input_transform.forward only type-checks for in_c == 1"

    # EqualizedLR scale: sqrt(2 / (in_ch * kh * kw)) with kh = kw = 1.
    scale = math.sqrt(2.0 / (in_c * 1 * 1))
    w_col = (weight[:, 0, 0, 0] * scale).astype(jnp.float32).reshape(out_c, 1)
    b_col = bias.astype(jnp.float32).reshape(out_c, 1)

    sr = _nearest_indices(H)   # output row r -> input row sr[r]
    sc = _nearest_indices(W)   # output col j -> input col sc[j]

    # Lane-dense "paired" plane layout (32, 128): plane element (r, j) lives at
    # [r // 2, (r % 2) * 64 + j], which has the same row-major flat order as (64, 64),
    # so the final reshape is free. Valid whenever consecutive output rows share a
    # source row (true for all 64 % H == 0, H <= 32 inputs). Otherwise fall back to a
    # (64, 64) plane (full-dim blocks, 64-lane stores).
    paired = all(sr[2 * p] == sr[2 * p + 1] for p in range(OUT_HW // 2))
    if paired:
        PR, PC = OUT_HW // 2, 2 * OUT_HW
        row_idx = jnp.asarray(sr[::2], dtype=jnp.int32)               # (32,)
        col_idx = jnp.asarray(sc + sc, dtype=jnp.int32)               # (128,)
    else:
        PR, PC = OUT_HW, OUT_HW
        row_idx = jnp.asarray(sr, dtype=jnp.int32)                    # (64,)
        col_idx = jnp.asarray(sc, dtype=jnp.int32)                    # (64,)

    rsel = jax.nn.one_hot(row_idx, H, dtype=jnp.float32)              # (PR, H)
    csel = jax.nn.one_hot(col_idx, W, dtype=jnp.float32).T            # (W, PC)

    c_tile = _pick_c_tile(out_c, PR * PC * 4)
    n_ct = out_c // c_tile

    x_f32 = x.astype(jnp.float32)

    out4 = pl.pallas_call(
        _input_transform_kernel,
        out_shape=jax.ShapeDtypeStruct((N, out_c, PR, PC), jnp.float32),
        grid_spec=pltpu.PrefetchScalarGridSpec(
            num_scalar_prefetch=0,
            grid=(N, n_ct),
            in_specs=[
                pl.BlockSpec((pl.Squeezed(), H, W), lambda n, ct: (n, 0, 0)),   # x plane
                pl.BlockSpec((PR, H), lambda n, ct: (0, 0)),                    # row one-hot
                pl.BlockSpec((W, PC), lambda n, ct: (0, 0)),                    # col one-hot
                pl.BlockSpec((c_tile, 1), lambda n, ct: (ct, 0)),               # scaled weights
                pl.BlockSpec((c_tile, 1), lambda n, ct: (ct, 0)),               # bias
            ],
            out_specs=pl.BlockSpec((pl.Squeezed(), c_tile, PR, PC),
                                   lambda n, ct: (n, ct, 0, 0)),
        ),
        compiler_params=pltpu.CompilerParams(
            dimension_semantics=("parallel", "parallel")),                      # megacore
    )(x_f32, rsel, csel, w_col, b_col)

    # Free layout plumbing: (N, out_c, PR, PC) is row-major identical to (N, out_c, 64, 64).
    return out4.reshape(N, out_c, OUT_HW, OUT_HW)


def _reference(x, weight, bias, in_c):
    """Pure-JAX reference matching the PyTorch forward."""
    N, H, W = x.shape
    scale = math.sqrt(2.0 / in_c)
    w_s = weight[:, 0, 0, 0] * scale                                  # (out_c,)
    y = x[:, None, :, :] * w_s[None, :, None, None] + bias[None, :, None, None]
    rows = jnp.asarray(_nearest_indices(H))
    cols = jnp.asarray(_nearest_indices(W))
    return y[:, :, rows, :][:, :, :, cols]


if __name__ == "__main__":
    N, in_c, out_c, H, W = 2, 1, 4, 16, 16

    key = jax.random.PRNGKey(0)
    kx, kw = jax.random.split(key)
    x = jax.random.normal(kx, (N, H, W), dtype=jnp.float32)
    # nn.init.normal_(weight) -> standard normal; nn.init.zeros_(bias)
    weight = jax.random.normal(kw, (out_c, in_c, 1, 1), dtype=jnp.float32)
    bias = jnp.zeros((out_c,), dtype=jnp.float32)

    out = input_transform_forward(x, weight, bias, in_c)
    out = jax.block_until_ready(out)

    ref = _reference(x, weight, bias, in_c)
    assert out.shape == (N, out_c, OUT_HW, OUT_HW), out.shape
    assert jnp.allclose(out, ref, atol=1e-5, rtol=1e-5), float(jnp.max(jnp.abs(out - ref)))
    print("KERNEL_OK")
</pallas_src>

<mosaic_0001>
module attributes {stable_mosaic.version = 11 : i64} {
  func.func @_input_transform_kernel(%arg0: i32, %arg1: i32, %arg2: memref<1x16x16xf32, #tpu.memory_space<vmem>>, %arg3: memref<32x16xf32, #tpu.memory_space<vmem>>, %arg4: memref<16x128xf32, #tpu.memory_space<vmem>>, %arg5: memref<4x1xf32, #tpu.memory_space<vmem>>, %arg6: memref<4x1xf32, #tpu.memory_space<vmem>>, %arg7: memref<1x4x32x128xf32, #tpu.memory_space<vmem>>) attributes {dimension_semantics = [#tpu.dimension_semantics<parallel>, #tpu.dimension_semantics<parallel>], iteration_bounds = array<i64: 2, 1>, scalar_prefetch = 0 : i64, scratch_operands = 0 : i64, tpu.core_type = #tpu.core_type<tc>, window_params = [{transform_indices = @transform_0, window_bounds = array<i64: 1, 16, 16>}, {pipeline_mode = #tpu.pipeline_mode<synchronous>, transform_indices = @transform_1, window_bounds = array<i64: 32, 16>}, {pipeline_mode = #tpu.pipeline_mode<synchronous>, transform_indices = @transform_2, window_bounds = array<i64: 16, 128>}, {transform_indices = @transform_3, window_bounds = array<i64: 4, 1>}, {transform_indices = @transform_4, window_bounds = array<i64: 4, 1>}, {transform_indices = @transform_5, window_bounds = array<i64: 1, 4, 32, 128>}]} {
    %c0 = arith.constant 0 : index
    %c0_0 = arith.constant 0 : index
    %c0_1 = arith.constant 0 : index
    %0 = vector.load %arg2[%c0, %c0_0, %c0_1] : memref<1x16x16xf32, #tpu.memory_space<vmem>>, vector<1x16x16xf32>
    %1 = vector.shape_cast %0 : vector<1x16x16xf32> to vector<16x16xf32>
    %c0_2 = arith.constant 0 : index
    %c0_3 = arith.constant 0 : index
    %2 = vector.load %arg3[%c0_2, %c0_3] : memref<32x16xf32, #tpu.memory_space<vmem>>, vector<32x16xf32>
    %c0_4 = arith.constant 0 : index
    %c0_5 = arith.constant 0 : index
    %3 = vector.load %arg4[%c0_4, %c0_5] : memref<16x128xf32, #tpu.memory_space<vmem>>, vector<16x128xf32>
    %4 = arith.truncf %1 : vector<16x16xf32> to vector<16x16xbf16>
    %5 = arith.extf %4 : vector<16x16xbf16> to vector<16x16xf32>
    %6 = arith.subf %1, %5 : vector<16x16xf32>
    %cst = arith.constant dense<0.000000e+00> : vector<16x128xf32>
    %7 = tpu.matmul %5, %3, %cst {dimension_numbers = #tpu.dot_dimension_numbers<[1], [0], [0], [1], [0, 0, 1, 1], [], []>} : vector<16x16xf32>, vector<16x128xf32>, vector<16x128xf32> -> vector<16x128xf32>
    %cst_6 = arith.constant dense<0.000000e+00> : vector<16x128xf32>
    %8 = tpu.matmul %6, %3, %cst_6 {dimension_numbers = #tpu.dot_dimension_numbers<[1], [0], [0], [1], [0, 0, 1, 1], [], []>} : vector<16x16xf32>, vector<16x128xf32>, vector<16x128xf32> -> vector<16x128xf32>
    %cst_7 = arith.constant dense<0.000000e+00> : vector<32x128xf32>
    %9 = tpu.matmul %2, %7, %cst_7 {dimension_numbers = #tpu.dot_dimension_numbers<[1], [0], [0], [1], [0, 0, 1, 1], [], []>} : vector<32x16xf32>, vector<16x128xf32>, vector<32x128xf32> -> vector<32x128xf32>
    %cst_8 = arith.constant dense<0.000000e+00> : vector<32x128xf32>
    %10 = tpu.matmul %2, %8, %cst_8 {dimension_numbers = #tpu.dot_dimension_numbers<[1], [0], [0], [1], [0, 0, 1, 1], [], []>} : vector<32x16xf32>, vector<16x128xf32>, vector<32x128xf32> -> vector<32x128xf32>
    %11 = arith.addf %9, %10 : vector<32x128xf32>
    %c0_9 = arith.constant 0 : index
    %c0_10 = arith.constant 0 : index
    %12 = vector.load %arg5[%c0_9, %c0_10] : memref<4x1xf32, #tpu.memory_space<vmem>>, vector<4x1xf32>
    %13 = vector.shape_cast %12 : vector<4x1xf32> to vector<4x1x1xf32>
    %c0_11 = arith.constant 0 : index
    %c0_12 = arith.constant 0 : index
    %14 = vector.load %arg6[%c0_11, %c0_12] : memref<4x1xf32, #tpu.memory_space<vmem>>, vector<4x1xf32>
    %15 = vector.shape_cast %14 : vector<4x1xf32> to vector<4x1x1xf32>
    %16 = vector.shape_cast %11 : vector<32x128xf32> to vector<1x32x128xf32>
    %17 = vector.broadcast %16 : vector<1x32x128xf32> to vector<4x32x128xf32>
    %18 = vector.broadcast %13 : vector<4x1x1xf32> to vector<4x32x128xf32>
    %19 = arith.mulf %17, %18 : vector<4x32x128xf32>
    %20 = vector.broadcast %15 : vector<4x1x1xf32> to vector<4x32x128xf32>
    %21 = arith.addf %19, %20 : vector<4x32x128xf32>
    %c0_13 = arith.constant 0 : index
    %c0_14 = arith.constant 0 : index
    %c0_15 = arith.constant 0 : index
    %c0_16 = arith.constant 0 : index
    %22 = vector.load %arg7[%c0_13, %c0_14, %c0_15, %c0_16] : memref<1x4x32x128xf32, #tpu.memory_space<vmem>>, vector<1x4x32x128xf32>
    %23 = vector.shape_cast %22 : vector<1x4x32x128xf32> to vector<4x32x128xf32>
    %24 = vector.shape_cast %21 : vector<4x32x128xf32> to vector<1x4x32x128xf32>
    tpu.vector_store %arg7[%c0_13, %c0_14, %c0_15, %c0_16], %24 {strides = array<i32>} : memref<1x4x32x128xf32, #tpu.memory_space<vmem>>, vector<1x4x32x128xf32>,
    return
  }
  func.func @transform_0(%arg0: i32, %arg1: i32) -> (i32, i32, i32) {
    %c0_i32 = arith.constant 0 : i32
    %c0_i32_0 = arith.constant 0 : i32
    %c0_i32_1 = arith.constant 0 : i32
    return %arg0, %c0_i32, %c0_i32_0 : i32, i32, i32
  }
  func.func @transform_1(%arg0: i32, %arg1: i32) -> (i32, i32) {
    %c0_i32 = arith.constant 0 : i32
    %c0_i32_0 = arith.constant 0 : i32
    %c0_i32_1 = arith.constant 0 : i32
    return %c0_i32, %c0_i32_0 : i32, i32
  }
  func.func @transform_2(%arg0: i32, %arg1: i32) -> (i32, i32) {
    %c0_i32 = arith.constant 0 : i32
    %c0_i32_0 = arith.constant 0 : i32
    %c0_i32_1 = arith.constant 0 : i32
    return %c0_i32, %c0_i32_0 : i32, i32
  }
  func.func @transform_3(%arg0: i32, %arg1: i32) -> (i32, i32) {
    %c0_i32 = arith.constant 0 : i32
    %c0_i32_0 = arith.constant 0 : i32
    return %arg1, %c0_i32 : i32, i32
  }
  func.func @transform_4(%arg0: i32, %arg1: i32) -> (i32, i32) {
    %c0_i32 = arith.constant 0 : i32
    %c0_i32_0 = arith.constant 0 : i32
    return %arg1, %c0_i32 : i32, i32
  }
  func.func @transform_5(%arg0: i32, %arg1: i32) -> (i32, i32, i32, i32) {
    %c0_i32 = arith.constant 0 : i32
    %c0_i32_0 = arith.constant 0 : i32
    %c0_i32_1 = arith.constant 0 : i32
    return %arg0, %arg1, %c0_i32, %c0_i32_0 : i32, i32, i32, i32
  }
}

</mosaic_0001>

<llo_original>
// kernel: tpu_custom_call.1
$region0: #{tpu_custom_call.1}
  #allocation0 [shape = 'u32[]', space=smem, size = 0x4, offset = 0x4, fixed_abs, tag = 'smem constant byte address 0x4 - core index']
  #allocation1 [shape = 'u32[72,128]{1,0:T(1,128)}', space=vmem, size = 0x9000, scoped, tag = 'internal scratch']
  %s0 = inlined_call_operand.vmem [shape: f32[2,16,16], index: 0, kind: input, shape index: {}]
  %s1 = inlined_call_operand.vmem [shape: f32[32,16], index: 1, kind: input, shape index: {}]
  %s2 = inlined_call_operand.vmem [shape: f32[16,128], index: 2, kind: input, shape index: {}]
  %s3 = inlined_call_operand.vmem [shape: f32[4,1], index: 3, kind: input, shape index: {}]
  %s4 = inlined_call_operand.vmem [shape: f32[4,1], index: 4, kind: input, shape index: {}]
  %s5 = inlined_call_operand.hbm [shape: f32[2,4,32,128], index: 5, kind: output, shape index: {}]
  %s6 = sld [smem:[#allocation0]]
  $region53: #{tpu_custom_call.1} parent=0
    _
  %s8 = ssub.s32 1, %s6
  %s9 = scalar_select 0, %s8, %s6
  $region1: #{tpu_custom_call.1} parent=0
    #allocation2 [shape = 'u8[131072]{0}', space=vmem, size = 0x20000, scoped, tag = 'output window, operand 0']
    #allocation3 [shape = 's32[2]{0}', space=sflag, size = 0x8, scoped, tag = 'scoped memory for tpu_custom_call.1']
    %10 = vsyncpa [#allocation3], 0
    %s11 = scalar_lea.sflag [#allocation3], 1
    %12 = vsyncpa %s11, 0
    loop: start=0, step=1, limit=4
    $region2: #{tpu_custom_call.1} parent=1 // loop_pre_header
      _
    $region3: #{tpu_custom_call.1} parent=1 // loop_header
      %s14 = sphi 0, %s18
      %p15 = scmp.ge.s32.totalorder %s14, 4
      %s21 = sphi 0, %s33
      %s22 = sphi 0, %s29
      %s23 = sphi 0, %s21
      %s24 = sphi 0, %s22
      %s25 = sphi 0, %s23
      %s26 = sphi 0, %s24
      %s36 = sphi 0, %s38
      %s39 = sphi 0, %s36
      %s40 = sphi 0, %s39
      %s56 = sphi 0, %s40
      %s60 = sphi 0, %s60
      %s62 = sphi 0, %s60
      %s63 = sphi 0, %s62
      %s77 = sphi 0, %s63
      %s81 = sphi 0, %s81
      %s83 = sphi 0, %s81
      %s84 = sphi 0, %s83
      %s98 = sphi 0, %s84
      %s104 = sphi 0, %s106
      %s107 = sphi 0, %s104
      %s108 = sphi 0, %s107
      %s124 = sphi 0, %s108
      %s130 = sphi 0, %s132
      %s133 = sphi 0, %s130
      %s134 = sphi 0, %s133
      %s150 = sphi 0, %s134
      %s158 = sphi 0, %s160
      %s161 = sphi 0, %s158
      %s162 = sphi 0, %s161
      %s178 = sphi 0, %s162
    $region4: #{tpu_custom_call.1} parent=1 // loop_header_branch
      %17 = sbr.rel (%p15) target = $region8
    $region5: #{tpu_custom_call.1} parent=1 // loop_body
      %s19 = ssub.s32 %s14, 1
      %s20 = ssub.s32 %s14, 2
      %s27 = sadd.s32 1, %s22
      %p28 = scmp.ge.s32.totalorder %s27, 1
      %s29 = scalar_select %p28, 0, %s27
      %s30 = sadd.s32 1, %s21
      %s31 = scalar_select %p28, %s30, %s21
      %p32 = scmp.ge.s32.totalorder %s31, 2
      %s33 = scalar_select %p32, 0, %s31
      %s34 = ssub.s32 %s21, %s33
      %p35 = scmp.eq.s32.totalorder %s34, 0
      %s37 = sadd.s32 %s36, 1
      %s38 = scalar_select %p35, %s36, %s37
      %p41 = pneg %p35
      %p42 = scmp.eq.s32.totalorder %s14, 1
      %p43 = por %p41, %p42
      %p44 = scmp.ne.s32.totalorder %s36, %s39
      %p45 = scmp.eq.s32.totalorder %s14, 0
      %p46 = por %p44, %p45
      %p47 = scmp.ne.s32.totalorder %s36, %s39
      %p48 = scmp.eq.s32.totalorder %s19, 1
      %p49 = por %p47, %p48
      %p50 = scmp.ne.s32.totalorder %s39, %s40
      %p51 = scmp.eq.s32.totalorder %s19, 0
      %p52 = por %p50, %p51
      %p53 = scmp.ne.s32.totalorder %s39, %s40
      %p54 = scmp.eq.s32.totalorder %s20, 1
      %p55 = por %p53, %p54
      %p57 = scmp.ne.s32.totalorder %s40, %s56
      %p58 = scmp.eq.s32.totalorder %s20, 0
      %p59 = por %p57, %p58
      %s61 = sadd.s32 %s60, 1
      %p64 = scmp.eq.s32.totalorder %s14, 1
      %p65 = scmp.ne.s32.totalorder %s60, %s62
      %p66 = scmp.eq.s32.totalorder %s14, 0
      %p67 = por %p65, %p66
      %p68 = scmp.ne.s32.totalorder %s60, %s62
      %p69 = scmp.eq.s32.totalorder %s19, 1
      %p70 = por %p68, %p69
      %p71 = scmp.ne.s32.totalorder %s62, %s63
      %p72 = scmp.eq.s32.totalorder %s19, 0
      %p73 = por %p71, %p72
      %p74 = scmp.ne.s32.totalorder %s62, %s63
      %p75 = scmp.eq.s32.totalorder %s20, 1
      %p76 = por %p74, %p75
      %p78 = scmp.ne.s32.totalorder %s63, %s77
      %p79 = scmp.eq.s32.totalorder %s20, 0
      %p80 = por %p78, %p79
      %s82 = sadd.s32 %s81, 1
      %p85 = scmp.eq.s32.totalorder %s14, 1
      %p86 = scmp.ne.s32.totalorder %s81, %s83
      %p87 = scmp.eq.s32.totalorder %s14, 0
      %p88 = por %p86, %p87
      %p89 = scmp.ne.s32.totalorder %s81, %s83
      %p90 = scmp.eq.s32.totalorder %s19, 1
      %p91 = por %p89, %p90
      %p92 = scmp.ne.s32.totalorder %s83, %s84
      %p93 = scmp.eq.s32.totalorder %s19, 0
      %p94 = por %p92, %p93
      %p95 = scmp.ne.s32.totalorder %s83, %s84
      %p96 = scmp.eq.s32.totalorder %s20, 1
      %p97 = por %p95, %p96
      %p99 = scmp.ne.s32.totalorder %s84, %s98
      %p100 = scmp.eq.s32.totalorder %s20, 0
      %p101 = por %p99, %p100
      %s102 = ssub.s32 %s22, %s29
      %p103 = scmp.eq.s32.totalorder %s102, 0
      %s105 = sadd.s32 %s104, 1
      %s106 = scalar_select %p103, %s104, %s105
      %p109 = pneg %p103
      %p110 = scmp.eq.s32.totalorder %s14, 1
      %p111 = por %p109, %p110
      %p112 = scmp.ne.s32.totalorder %s104, %s107
      %p113 = scmp.eq.s32.totalorder %s14, 0
      %p114 = por %p112, %p113
      %p115 = scmp.ne.s32.totalorder %s104, %s107
      %p116 = scmp.eq.s32.totalorder %s19, 1
      %p117 = por %p115, %p116
      %p118 = scmp.ne.s32.totalorder %s107, %s108
      %p119 = scmp.eq.s32.totalorder %s19, 0
      %p120 = por %p118, %p119
      %p121 = scmp.ne.s32.totalorder %s107, %s108
      %p122 = scmp.eq.s32.totalorder %s20, 1
      %p123 = por %p121, %p122
      %p125 = scmp.ne.s32.totalorder %s108, %s124
      %p126 = scmp.eq.s32.totalorder %s20, 0
      %p127 = por %p125, %p126
      %s128 = ssub.s32 %s22, %s29
      %p129 = scmp.eq.s32.totalorder %s128, 0
      %s131 = sadd.s32 %s130, 1
      %s132 = scalar_select %p129, %s130, %s131
      %p135 = pneg %p129
      %p136 = scmp.eq.s32.totalorder %s14, 1
      %p137 = por %p135, %p136
      %p138 = scmp.ne.s32.totalorder %s130, %s133
      %p139 = scmp.eq.s32.totalorder %s14, 0
      %p140 = por %p138, %p139
      %p141 = scmp.ne.s32.totalorder %s130, %s133
      %p142 = scmp.eq.s32.totalorder %s19, 1
      %p143 = por %p141, %p142
      %p144 = scmp.ne.s32.totalorder %s133, %s134
      %p145 = scmp.eq.s32.totalorder %s19, 0
      %p146 = por %p144, %p145
      %p147 = scmp.ne.s32.totalorder %s133, %s134
      %p148 = scmp.eq.s32.totalorder %s20, 1
      %p149 = por %p147, %p148
      %p151 = scmp.ne.s32.totalorder %s134, %s150
      %p152 = scmp.eq.s32.totalorder %s20, 0
      %p153 = por %p151, %p152
      %s154 = ssub.s32 %s21, %s33
      %s155 = ssub.s32 %s22, %s29
      %s156 = sor.u32 %s154, %s155
      %p157 = scmp.eq.s32.totalorder %s156, 0
      %s159 = sadd.s32 %s158, 1
      %s160 = scalar_select %p157, %s158, %s159
      %p163 = pneg %p157
      %p164 = scmp.eq.s32.totalorder %s14, 1
      %p165 = por %p163, %p164
      %p166 = scmp.ne.s32.totalorder %s158, %s161
      %p167 = scmp.eq.s32.totalorder %s14, 0
      %p168 = por %p166, %p167
      %p169 = scmp.ne.s32.totalorder %s158, %s161
      %p170 = scmp.eq.s32.totalorder %s19, 1
      %p171 = por %p169, %p170
      %p172 = scmp.ne.s32.totalorder %s161, %s162
      %p173 = scmp.eq.s32.totalorder %s19, 0
      %p174 = por %p172, %p173
      %p175 = scmp.ne.s32.totalorder %s161, %s162
      %p176 = scmp.eq.s32.totalorder %s20, 1
      %p177 = por %p175, %p176
      %p179 = scmp.ne.s32.totalorder %s162, %s178
      %p180 = scmp.eq.s32.totalorder %s20, 0
      %p181 = por %p179, %p180
      %p182 = scmp.le.s32.totalorder 1, %s14
      %p183 = scmp.lt.s32.totalorder %s14, 3
      %p184 = pnand %p182, %p183
      %p185 = pneg %p184
      // Predicated region
      $region9: #{tpu_custom_call.1} parent=5 // pred_check
        _
      $region10: #{tpu_custom_call.1} parent=5 // pred_check_branch
        %187 = sbr.rel (%p184) target = $region12
      $region11: #{tpu_custom_call.1} parent=5 // pred_region
        %s188 = ssub.s32 %s14, 1
        // Predicated region
        $region13: #{tpu_custom_call.1} parent=11 // pred_check
          %p189 = pneg %p73
        $region14: #{tpu_custom_call.1} parent=11 // pred_check_branch
          %191 = sbr.rel (%p189) target = $region16
        $region15: #{tpu_custom_call.1} parent=11 // pred_region
          _
        $region16: #{tpu_custom_call.1} parent=11 // pred_fallthru
          _
        // Predicated region
        $region17: #{tpu_custom_call.1} parent=11 // pred_check
          %p192 = pneg %p94
        $region18: #{tpu_custom_call.1} parent=11 // pred_check_branch
          %194 = sbr.rel (%p192) target = $region20
        $region19: #{tpu_custom_call.1} parent=11 // pred_region
          _
        $region20: #{tpu_custom_call.1} parent=11 // pred_fallthru
          _
        // Predicated region
        $region21: #{tpu_custom_call.1} parent=11 // pred_check
          %p195 = pneg %p120
        $region22: #{tpu_custom_call.1} parent=11 // pred_check_branch
          %197 = sbr.rel (%p195) target = $region24
        $region23: #{tpu_custom_call.1} parent=11 // pred_region
          %p198 = scmp.lt.s32.totalorder %s24, 0
          %s199 = scalar_select %p198, %s24, 0
          %s200 = smul.addr %s199, 4
          %s201 = scalar_lea.vmem %s3, %s200
        $region24: #{tpu_custom_call.1} parent=11 // pred_fallthru
          _
        // Predicated region
        $region25: #{tpu_custom_call.1} parent=11 // pred_check
          %p202 = pneg %p146
        $region26: #{tpu_custom_call.1} parent=11 // pred_check_branch
          %204 = sbr.rel (%p202) target = $region28
        $region27: #{tpu_custom_call.1} parent=11 // pred_region
          %p205 = scmp.lt.s32.totalorder %s24, 0
          %s206 = scalar_select %p205, %s24, 0
          %s207 = smul.addr %s206, 4
          %s208 = scalar_lea.vmem %s4, %s207
        $region28: #{tpu_custom_call.1} parent=11 // pred_fallthru
          _
      $region12: #{tpu_custom_call.1} parent=5 // pred_fallthru
        _
      %p209 = scmp.lt.s32.totalorder %s14, 2
      // Predicated region
      $region29: #{tpu_custom_call.1} parent=5 // pred_check
        %p210 = pneg %p209
      $region30: #{tpu_custom_call.1} parent=5 // pred_check_branch
        %212 = sbr.rel (%p210) target = $region32
      $region31: #{tpu_custom_call.1} parent=5 // pred_region
        // Predicated region
        $region33: #{tpu_custom_call.1} parent=31 // pred_check
          %p213 = pneg %p46
        $region34: #{tpu_custom_call.1} parent=31 // pred_check_branch
          %215 = sbr.rel (%p213) target = $region36
        $region35: #{tpu_custom_call.1} parent=31 // pred_region
          %p216 = scmp.lt.s32.totalorder %s21, 1
          %s217 = scalar_select %p216, %s21, 1
          %s218 = smul.addr %s217, 2
          %s219 = smul.addr %s218, 8
          %s220 = scalar_lea.vmem %s0, %s219
        $region36: #{tpu_custom_call.1} parent=31 // pred_fallthru
          _
      $region32: #{tpu_custom_call.1} parent=5 // pred_fallthru
        _
      %p221 = scmp.le.s32.totalorder 1, %s14
      %p222 = scmp.lt.s32.totalorder %s14, 3
      %p223 = pnand %p221, %p222
      %p224 = pneg %p223
      // Predicated region
      $region37: #{tpu_custom_call.1} parent=5 // pred_check
        _
      $region38: #{tpu_custom_call.1} parent=5 // pred_check_branch
        %226 = sbr.rel (%p223) target = $region40
      $region39: #{tpu_custom_call.1} parent=5 // pred_region
        %s227 = ssub.s32 %s14, 1
        %p228 = scmp.lt.s32.totalorder %s23, 1
        %s229 = scalar_select %p228, %s23, 1
        %s230 = smul.addr %s229, 2
        %s231 = smul.addr %s230, 8
        %s232 = scalar_lea.vmem %s0, %s231
        %p233 = pneg %p52
        %p234 = pneg %p49
        %p235 = pneg %p73
        %p236 = pneg %p70
        %p237 = pneg %p94
        %p238 = pneg %p91
        %p239 = scmp.lt.s32.totalorder %s24, 0
        %s240 = scalar_select %p239, %s24, 0
        %s241 = smul.addr %s240, 4
        %s242 = scalar_lea.vmem %s3, %s241
        %p243 = pneg %p120
        %p244 = pneg %p117
        %p245 = scmp.lt.s32.totalorder %s24, 0
        %s246 = scalar_select %p245, %s24, 0
        %s247 = smul.addr %s246, 4
        %s248 = scalar_lea.vmem %s4, %s247
        %p249 = pneg %p146
        %p250 = pneg %p143
        %p251 = pneg %p174
        %p252 = pneg %p171
        %s253 = sand.u32 %s161, 1
        %s254 = scalar_lea.sflag [#allocation3], %s253
        %s255 = sand.u32 %s161, 1
        %s256 = smul.addr %s255, 128
        %s257 = scalar_lea.vmem [#allocation2], %s256
        %p258 = scmp.lt.s32.totalorder %s23, 1
        %s259 = scalar_select %p258, %s23, 1
        %s260 = smul.addr %s259, 2
        %s261 = smul.addr %s260, 8
        %s262 = scalar_lea.vmem %s0, %s261
        %p263 = scmp.lt.s32.totalorder %s24, 0
        %s264 = scalar_select %p263, %s24, 0
        %s265 = smul.addr %s264, 4
        %s266 = scalar_lea.vmem %s3, %s265
        %p267 = scmp.lt.s32.totalorder %s24, 0
        %s268 = scalar_select %p267, %s24, 0
        %s269 = smul.addr %s268, 4
        %s270 = scalar_lea.vmem %s4, %s269
        %s271 = smul.u32 4, %s24
        %v272 = vld [vmem:[%s262] sm:$0xff]
        %v273 = vld [vmem:[%s262 + $0x8] sm:$0xff]
        %v274 = vld [vmem:[%s1] sm:$0xff]
        %v275 = vld [vmem:[%s1 + $0x8] sm:$0xff]
        %v276 = vld [vmem:[%s1 + $0x10] sm:$0xff]
        %v277 = vld [vmem:[%s1 + $0x18] sm:$0xff]
        %v278 = vld [vmem:[%s2] sm:$0xff]
        %v279 = vld [vmem:[%s2 + $0x8] sm:$0xff]
        %v280 = vpack.c.bf16 %v272, %v272
        %v281 = vpack.c.bf16 %v273, %v273
        %v282 = vunpack.c.l.bf16 %v280
        %v283 = vunpack.c.l.bf16 %v281
        %v284 = vsub.f32 %v272, %v282
        %v285 = vsub.f32 %v273, %v283
        %vm286 = vcmask 130048
        %v288 = vsel %vm286, %v282, 0
        %v291 = vsel %vm286, %v283, 0
        %293 = vmatpush.msra.mxu0 0.0
        %294 = vmatpush.msra.mxu0 0.0
        %295 = vmatpush.msra.mxu0 0.0
        %296 = vmatpush.msra.mxu0 0.0
        %297 = vmatpush.msra.mxu0 0.0
        %298 = vmatpush.msra.mxu0 0.0
        %299 = vmatpush.msra.mxu0 0.0
        %300 = vmatpush.msra.mxu0 0.0
        %301 = vmatpush.msra.mxu0 0.0
        %302 = vmatpush.msra.mxu0 0.0
        %303 = vmatpush.msra.mxu0 0.0
        %304 = vmatpush.msra.mxu0 0.0
        %305 = vmatpush.msra.mxu0 0.0
        %306 = vmatpush.msra.mxu0 0.0
        %307 = vmatpush.msra.mxu0 %v279
        %308 = vmatpush.msra.mxu0 %v278
        %309 = vmatmul.f32.gmra.mxu0 %v288
        %v310 = vpop.f32.mrf.mxu0
        %v311 = vadd.f32 0.0, %v310
        %312 = vmatmul.f32.gmra.mxu0 %v291
        %v313 = vpop.f32.mrf.mxu0
        %v314 = vadd.f32 0.0, %v313
        %315 = vdwg.mxu0
        %v317 = vsel %vm286, %v284, 0
        %v320 = vsel %vm286, %v285, 0
        %322 = vmatpush.msra.mxu0 0.0
        %323 = vmatpush.msra.mxu0 0.0
        %324 = vmatpush.msra.mxu0 0.0
        %325 = vmatpush.msra.mxu0 0.0
        %326 = vmatpush.msra.mxu0 0.0
        %327 = vmatpush.msra.mxu0 0.0
        %328 = vmatpush.msra.mxu0 0.0
        %329 = vmatpush.msra.mxu0 0.0
        %330 = vmatpush.msra.mxu0 0.0
        %331 = vmatpush.msra.mxu0 0.0
        %332 = vmatpush.msra.mxu0 0.0
        %333 = vmatpush.msra.mxu0 0.0
        %334 = vmatpush.msra.mxu0 0.0
        %335 = vmatpush.msra.mxu0 0.0
        %336 = vmatpush.msra.mxu0 %v279
        %337 = vmatpush.msra.mxu0 %v278
        %338 = vmatmul.f32.gmra.mxu0 %v317
        %v339 = vpop.f32.mrf.mxu0
        %v340 = vadd.f32 0.0, %v339
        %341 = vmatmul.f32.gmra.mxu0 %v320
        %v342 = vpop.f32.mrf.mxu0
        %v343 = vadd.f32 0.0, %v342
        %344 = vdwg.mxu0
        %v346 = vsel %vm286, %v274, 0
        %v349 = vsel %vm286, %v275, 0
        %v352 = vsel %vm286, %v276, 0
        %v355 = vsel %vm286, %v277, 0
        %357 = vmatpush.msra.mxu0 0.0
        %358 = vmatpush.msra.mxu0 0.0
        %359 = vmatpush.msra.mxu0 0.0
        %360 = vmatpush.msra.mxu0 0.0
        %361 = vmatpush.msra.mxu0 0.0
        %362 = vmatpush.msra.mxu0 0.0
        %363 = vmatpush.msra.mxu0 0.0
        %364 = vmatpush.msra.mxu0 0.0
        %365 = vmatpush.msra.mxu0 0.0
        %366 = vmatpush.msra.mxu0 0.0
        %367 = vmatpush.msra.mxu0 0.0
        %368 = vmatpush.msra.mxu0 0.0
        %369 = vmatpush.msra.mxu0 0.0
        %370 = vmatpush.msra.mxu0 0.0
        %371 = vmatpush.msra.mxu0 %v343
        %372 = vmatpush.msra.mxu0 %v340
        %373 = vmatmul.f32.gmra.mxu0 %v346
        %v374 = vpop.f32.mrf.mxu0
        %v375 = vadd.f32 0.0, %v374
        %376 = vmatmul.f32.gmra.mxu0 %v349
        %v377 = vpop.f32.mrf.mxu0
        %v378 = vadd.f32 0.0, %v377
        %379 = vmatmul.f32.gmra.mxu0 %v352
        %v380 = vpop.f32.mrf.mxu0
        %v381 = vadd.f32 0.0, %v380
        %382 = vmatmul.f32.gmra.mxu0 %v355
        %v383 = vpop.f32.mrf.mxu0
        %v384 = vadd.f32 0.0, %v383
        %385 = vdwg.mxu0
        %386 = vmatpush.msra.mxu0 0.0
        %387 = vmatpush.msra.mxu0 0.0
        %388 = vmatpush.msra.mxu0 0.0
        %389 = vmatpush.msra.mxu0 0.0
        %390 = vmatpush.msra.mxu0 0.0
        %391 = vmatpush.msra.mxu0 0.0
        %392 = vmatpush.msra.mxu0 0.0
        %393 = vmatpush.msra.mxu0 0.0
        %394 = vmatpush.msra.mxu0 0.0
        %395 = vmatpush.msra.mxu0 0.0
        %396 = vmatpush.msra.mxu0 0.0
        %397 = vmatpush.msra.mxu0 0.0
        %398 = vmatpush.msra.mxu0 0.0
        %399 = vmatpush.msra.mxu0 0.0
        %400 = vmatpush.msra.mxu0 %v314
        %401 = vmatpush.msra.mxu0 %v311
        %402 = vmatmul.f32.gmra.mxu0 %v346
        %v403 = vpop.f32.mrf.mxu0
        %v404 = vadd.f32 %v375, %v403
        %405 = vmatmul.f32.gmra.mxu0 %v349
        %v406 = vpop.f32.mrf.mxu0
        %v407 = vadd.f32 %v378, %v406
        %408 = vmatmul.f32.gmra.mxu0 %v352
        %v409 = vpop.f32.mrf.mxu0
        %v410 = vadd.f32 %v381, %v409
        %411 = vmatmul.f32.gmra.mxu0 %v355
        %v412 = vpop.f32.mrf.mxu0
        %v413 = vadd.f32 %v384, %v412
        %414 = vdwg.mxu0
        %v415 = vld [vmem:[%s266] sm:$0xf]
        %v417 = vrot.slane %v415, 1
        %v418 = vrot.slane %v415, 2
        %v419 = vrot.slane %v415, 3
        %v420 = vld [vmem:[%s270] sm:$0xf]
        %v422 = vrot.slane %v420, 1
        %v423 = vrot.slane %v420, 2
        %v424 = vrot.slane %v420, 3
        %v425 = vperm.slane %v415, 0
        %v426 = vperm.slane %v417, 0
        %v427 = vperm.slane %v418, 0
        %v428 = vperm.slane %v419, 0
        %429 = vset.pattern.permute.xlu0 0
        %430 = vperm.xlu0 %429, %v425
        %v431 = vpop.permute.xlu0 %430
        %433 = vset.pattern.permute.xlu0 0
        %434 = vperm.xlu0 %433, %v426
        %v435 = vpop.permute.xlu0 %434
        %437 = vset.pattern.permute.xlu0 0
        %438 = vperm.xlu0 %437, %v427
        %v439 = vpop.permute.xlu0 %438
        %441 = vset.pattern.permute.xlu0 0
        %442 = vperm.xlu0 %441, %v428
        %v443 = vpop.permute.xlu0 %442
        %v445 = vmul.f32 %v404, %v431
        %v446 = vmul.f32 %v407, %v431
        %v447 = vmul.f32 %v410, %v431
        %v448 = vmul.f32 %v413, %v431
        %v449 = vmul.f32 %v404, %v435
        %v450 = vmul.f32 %v407, %v435
        %v451 = vmul.f32 %v410, %v435
        %v452 = vmul.f32 %v413, %v435
        %v453 = vmul.f32 %v404, %v439
        %v454 = vmul.f32 %v407, %v439
        %v455 = vmul.f32 %v410, %v439
        %v456 = vmul.f32 %v413, %v439
        %v457 = vmul.f32 %v404, %v443
        %v458 = vmul.f32 %v407, %v443
        %v459 = vmul.f32 %v410, %v443
        %v460 = vmul.f32 %v413, %v443
        %v461 = vperm.slane %v420, 0
        %v462 = vperm.slane %v422, 0
        %v463 = vperm.slane %v423, 0
        %v464 = vperm.slane %v424, 0
        %465 = vset.pattern.permute.xlu0 0
        %466 = vperm.xlu0 %465, %v461
        %v467 = vpop.permute.xlu0 %466
        %469 = vset.pattern.permute.xlu0 0
        %470 = vperm.xlu0 %469, %v462
        %v471 = vpop.permute.xlu0 %470
        %473 = vset.pattern.permute.xlu0 0
        %474 = vperm.xlu0 %473, %v463
        %v475 = vpop.permute.xlu0 %474
        %477 = vset.pattern.permute.xlu0 0
        %478 = vperm.xlu0 %477, %v464
        %v479 = vpop.permute.xlu0 %478
        %v481 = vadd.f32 %v445, %v467
        %v482 = vadd.f32 %v446, %v467
        %v483 = vadd.f32 %v447, %v467
        %v484 = vadd.f32 %v448, %v467
        %v485 = vadd.f32 %v449, %v471
        %v486 = vadd.f32 %v450, %v471
        %v487 = vadd.f32 %v451, %v471
        %v488 = vadd.f32 %v452, %v471
        %v489 = vadd.f32 %v453, %v475
        %v490 = vadd.f32 %v454, %v475
        %v491 = vadd.f32 %v455, %v475
        %v492 = vadd.f32 %v456, %v475
        %v493 = vadd.f32 %v457, %v479
        %v494 = vadd.f32 %v458, %v479
        %v495 = vadd.f32 %v459, %v479
        %v496 = vadd.f32 %v460, %v479
        %497 = vst [vmem:[%s257] sm:$0xff] %v481
        %498 = vst [vmem:[%s257 + $0x8] sm:$0xff] %v482
        %499 = vst [vmem:[%s257 + $0x10] sm:$0xff] %v483
        %500 = vst [vmem:[%s257 + $0x18] sm:$0xff] %v484
        %501 = vst [vmem:[%s257 + $0x20] sm:$0xff] %v485
        %502 = vst [vmem:[%s257 + $0x28] sm:$0xff] %v486
        %503 = vst [vmem:[%s257 + $0x30] sm:$0xff] %v487
        %504 = vst [vmem:[%s257 + $0x38] sm:$0xff] %v488
        %505 = vst [vmem:[%s257 + $0x40] sm:$0xff] %v489
        %506 = vst [vmem:[%s257 + $0x48] sm:$0xff] %v490
        %507 = vst [vmem:[%s257 + $0x50] sm:$0xff] %v491
        %508 = vst [vmem:[%s257 + $0x58] sm:$0xff] %v492
        %509 = vst [vmem:[%s257 + $0x60] sm:$0xff] %v493
        %510 = vst [vmem:[%s257 + $0x68] sm:$0xff] %v494
        %511 = vst [vmem:[%s257 + $0x70] sm:$0xff] %v495
        %512 = vst [vmem:[%s257 + $0x78] sm:$0xff] %v496
        %s513 = sand.u32 %s161, 1
        %s514 = scalar_lea.sflag [#allocation3], %s513
        %s515 = sand.u32 %s161, 1
        %s516 = smul.addr %s515, 128
        %s517 = scalar_lea.vmem [#allocation2], %s516
        // Predicated region
        $region41: #{tpu_custom_call.1} parent=39 // pred_check
          %p518 = pneg %p171
        $region42: #{tpu_custom_call.1} parent=39 // pred_check_branch
          %520 = sbr.rel (%p518) target = $region44
        $region43: #{tpu_custom_call.1} parent=39 // pred_region
          %s521 = smul.u32 4, %s24
          %523 = vsyncadd %s514, 0
          %s524 = smul.addr %s521, 4
          %s525 = smul.addr %s23, 16
          %s526 = sadd.s32 %s524, %s525
          %s527 = smul.addr %s526, 8
          %s528 = scalar_lea.hbm %s5, %s527
          %s529 = sshll.u32 %s517, 4
          %s530 = int_to_ptr.vmem [resolvable:$true] %s529
          %s531 = sshll.u32 %s528, 4
          %s532 = int_to_ptr.hbm [resolvable:$true] %s531
          %537 = dma.vmem_to_hbm [thread:$0]  %s530, 2048, %s532, %s514, 128, 128, 8
        $region44: #{tpu_custom_call.1} parent=39 // pred_fallthru
          _
      $region40: #{tpu_custom_call.1} parent=5 // pred_fallthru
        _
      %p538 = scmp.le.s32.totalorder 2, %s14
      // Predicated region
      $region45: #{tpu_custom_call.1} parent=5 // pred_check
        %p539 = pneg %p538
      $region46: #{tpu_custom_call.1} parent=5 // pred_check_branch
        %541 = sbr.rel (%p539) target = $region48
      $region47: #{tpu_custom_call.1} parent=5 // pred_region
        %s542 = ssub.s32 %s14, 2
        // Predicated region
        $region49: #{tpu_custom_call.1} parent=47 // pred_check
          %p543 = pneg %p177
        $region50: #{tpu_custom_call.1} parent=47 // pred_check_branch
          %545 = sbr.rel (%p543) target = $region52
        $region51: #{tpu_custom_call.1} parent=47 // pred_region
          %s546 = sand.u32 %s162, 1
          %s547 = scalar_lea.sflag [#allocation3], %s546
          %s548 = sand.u32 %s162, 1
          %s549 = smul.addr %s548, 128
          %s550 = scalar_lea.vmem [#allocation2], %s549
          %552 = dma.done %s547, 2048
        $region52: #{tpu_custom_call.1} parent=47 // pred_fallthru
          _
      $region48: #{tpu_custom_call.1} parent=5 // pred_fallthru
        _
    $region6: #{tpu_custom_call.1} parent=1 // loop_footer
      %s18 = sadd.s32 1, %s14
    $region7: #{tpu_custom_call.1} parent=1 // loop_footer_branch
      %13 = sbr.rel target = $region3
    $region8: #{tpu_custom_call.1} parent=1 // loop_exit
      _
    %553 = vsyncpa [#allocation3], 1
    %s554 = scalar_lea.sflag [#allocation3], 1
    %555 = vsyncpa %s554, 1

</llo_original>
